<compile_context>
chip_gen: v6e
topology: v6e:2x2x1
jax: 0.10.0
libtpu: 0.0.40
codegen_flags: <defaults>
</compile_context>

<pallas_src>
import jax
import jax.numpy as jnp
from jax.experimental import pallas as pl
from jax.experimental.pallas import tpu as pltpu


_LANES = 1024     # 8 full f32 vregs wide -> unmasked, lane-dense stores
_MAX_TM = 2048    # 2048 * 1024 * 4 B = 8 MiB per block (16 MiB double-buffered)


def _round_up(v, m):
    return ((v + m - 1) // m) * m


def _fill_kernel(var_ref, o_ref):
    # var_ref: SMEM scalar-prefetch ref, shape (1,), float32 (raw `variance`)
    # o_ref:   VMEM output tile, shape (tm, 1024), float32
    # Keep the transcendental vectorized on a single vreg (scalar-unit exp has
    # no clean lowering); one EUP op per grid step is free next to the stores.
    col = jnp.full((1, 1), var_ref[0], dtype=jnp.float32)
    fill = jnp.exp(col * 10.0)
    o_ref[...] = jnp.broadcast_to(fill, o_ref.shape)


def single_variance_forward(x, variance):
    """Pallas equivalent of SingleVarianceNetwork.forward.

    Args:
      x: array whose leading axis is the batch of query points; only len(x)
         is used (values are ignored), matching the PyTorch module.
      variance: scalar (Python float or JAX scalar) learnable parameter.

    Returns:
      float32 array of shape [len(x), 1] filled with exp(variance * 10.0).
    """
    n = x.shape[0]
    if n == 0:
        return jnp.zeros((0, 1), jnp.float32)

    var_arr = jnp.reshape(jnp.asarray(variance, jnp.float32), (1,))

    # Lane-dense slab: rows x 1024 f32 covers n elements (padded up).
    rows = pl.cdiv(n, _LANES)
    if rows <= 8:
        tm = rows                                   # tiny fill: single full-dim block
    else:
        # >= 2 blocks so v7x's two TensorCores split the fill and the output
        # writeback stays pipelined; rows/block rounded up to a sublane
        # multiple of 8 and capped at _MAX_TM (VMEM budget).
        nblocks = max(2, pl.cdiv(rows, _MAX_TM))
        tm = min(_MAX_TM, _round_up(pl.cdiv(rows, nblocks), 8))
    grid = (pl.cdiv(rows, tm),)

    slab = pl.pallas_call(
        _fill_kernel,
        out_shape=jax.ShapeDtypeStruct((rows, _LANES), jnp.float32),
        grid_spec=pltpu.PrefetchScalarGridSpec(
            num_scalar_prefetch=1,
            grid=grid,
            in_specs=[],
            out_specs=pl.BlockSpec((tm, _LANES), lambda i, var: (i, 0)),
        ),
        compiler_params=pltpu.CompilerParams(
            dimension_semantics=("parallel",)),
        cost_estimate=pl.CostEstimate(
            flops=0,
            transcendentals=grid[0],
            bytes_accessed=rows * _LANES * 4),
    )(var_arr)

    # Layout plumbing back to the PyTorch-visible [N, 1] shape.
    if n % _LANES == 0:
        return slab.reshape(n, 1)                   # contiguous -> copy-free
    # TODO(synk): when this feeds a fused consumer (the 1/s term in the NeuS
    # renderer), prefer a plain jnp.full((n, 1), exp(var*10)) so the constant
    # never materializes; standalone, this slice is one extra N*4 B copy.
    return slab.reshape(-1)[:n].reshape(n, 1)


if __name__ == "__main__":
    # Deterministic parameter init (mirrors nn.Parameter(torch.tensor(init_val))).
    init_val = 0.3
    variance = jnp.asarray(init_val, dtype=jnp.float32)
    key = jax.random.PRNGKey(0)

    def ref_fn(n):
        return jnp.ones((n, 1), jnp.float32) * jnp.exp(variance * 10.0)

    # Small example input consistent with NeuRIS usage (N points x 3 coords);
    # contents are irrelevant, only len(x) matters.
    x = jax.random.normal(key, (8, 3), dtype=jnp.float32)
    out = jax.block_until_ready(single_variance_forward(x, variance))
    assert out.shape == (8, 1)
    assert jnp.allclose(out, ref_fn(8), rtol=1e-5, atol=1e-6)

    # N not a multiple of the 1024-lane slab (tail-slice path).
    x2 = jax.random.normal(key, (3000, 3), dtype=jnp.float32)
    out2 = jax.block_until_ready(single_variance_forward(x2, variance))
    assert out2.shape == (3000, 1)
    assert jnp.allclose(out2, ref_fn(3000), rtol=1e-5, atol=1e-6)

    # N an exact multiple of 1024 (copy-free reshape fast path).
    x3 = jax.random.normal(key, (2048, 3), dtype=jnp.float32)
    out3 = jax.block_until_ready(single_variance_forward(x3, variance))
    assert out3.shape == (2048, 1)
    assert jnp.allclose(out3, ref_fn(2048), rtol=1e-5, atol=1e-6)

    # Multi-block path (rows > 8 -> grid >= 2) with a partial last block.
    x4 = jax.random.normal(key, (20000, 3), dtype=jnp.float32)
    out4 = jax.block_until_ready(single_variance_forward(x4, variance))
    assert out4.shape == (20000, 1)
    assert jnp.allclose(out4, ref_fn(20000), rtol=1e-5, atol=1e-6)

    # n == 0 edge case (guarded early return).
    x0 = jnp.zeros((0, 3), jnp.float32)
    out0 = jax.block_until_ready(single_variance_forward(x0, variance))
    assert out0.shape == (0, 1)

    print("KERNEL_OK")
</pallas_src>

<mosaic_0001>
module attributes {stable_mosaic.version = 11 : i64} {
  func.func @_fill_kernel(%arg0: i32, %arg1: memref<1xf32, #tpu.memory_space<smem>>, %arg2: memref<1x1024xf32, #tpu.memory_space<vmem>>) attributes {dimension_semantics = [#tpu.dimension_semantics<parallel>], iteration_bounds = array<i64: 1>, scalar_prefetch = 1 : i64, scratch_operands = 0 : i64, tpu.core_type = #tpu.core_type<tc>, window_params = [{transform_indices = @transform_0, window_bounds = array<i64: 1, 1024>}]} {
    %c0 = arith.constant 0 : index
    %0 = memref.load %arg1[%c0] : memref<1xf32, #tpu.memory_space<smem>>
    %1 = vector.broadcast %0 : f32 to vector<1x1xf32>
    %cst = arith.constant 1.000000e+01 : f32
    %2 = vector.broadcast %cst : f32 to vector<1x1xf32>
    %3 = arith.mulf %1, %2 : vector<1x1xf32>
    %4 = math.exp %3 : vector<1x1xf32>
    %5 = vector.shape_cast %4 : vector<1x1xf32> to vector<1x1xf32>
    %6 = vector.broadcast %5 : vector<1x1xf32> to vector<1x1024xf32>
    %c0_0 = arith.constant 0 : index
    %c0_1 = arith.constant 0 : index
    %7 = vector.load %arg2[%c0_0, %c0_1] : memref<1x1024xf32, #tpu.memory_space<vmem>>, vector<1x1024xf32>
    tpu.vector_store %arg2[%c0_0, %c0_1], %6 {strides = array<i32>} : memref<1x1024xf32, #tpu.memory_space<vmem>>, vector<1x1024xf32>,
    return
  }
  func.func @transform_0(%arg0: i32, %arg1: memref<1xf32, #tpu.memory_space<smem>>) -> (i32, i32) {
    %c0_i32 = arith.constant 0 : i32
    %c0_i32_0 = arith.constant 0 : i32
    return %arg0, %c0_i32 : i32, i32
  }
}

</mosaic_0001>

<llo_original>
// kernel: tpu_custom_call.1
$region0: #{tpu_custom_call.1}
  #allocation0 [shape = 'u32[]', space=smem, size = 0x4, offset = 0x4, fixed_abs, tag = 'smem constant byte address 0x4 - core index']
  #allocation1 [shape = 'u32[144,128]{1,0:T(1,128)}', space=vmem, size = 0x12000, scoped, tag = 'internal scratch']
  #allocation2 [shape = 's32[1]{0}', space=sflag, size = 0x4, scoped, tag = 'scoped memory for tpu_custom_call.1']
  #allocation3 [shape = 'f32[1]{0:T(128)S(6)}', space=smem, size = 0x200, scoped, tag = 'prefetched SMEM operand 0']
  %s0 = inlined_call_operand.<no memory space> [shape: f32[1], index: 0, kind: input, shape index: {}]
  %s1 = inlined_call_operand.hbm [shape: f32[1,1024], index: 1, kind: output, shape index: {}]
  %s2 = sld [smem:[#allocation0]]
  $region10: #{tpu_custom_call.1} parent=0
    _
  %s4 = ssub.s32 1, %s2
  %s5 = scalar_select 0, %s4, %s2
  %6 = sst [smem:[#allocation3]] %s0
  $region1: #{tpu_custom_call.1} parent=0
    #allocation4 [shape = 'u8[4096]{0}', space=vmem, size = 0x1000, scoped, tag = 'output window, operand 0, single buffered']
    #allocation5 [shape = 's32[1]{0}', space=sflag, size = 0x4, scoped, tag = 'scoped memory for tpu_custom_call.1']
    %7 = vsyncpa [#allocation5], 0
    %s8 = sld [smem:[#allocation3]]
    %v9 = vstv %s8
    %v10 = vmul.f32 %v9, 10.0
    %v11 = vmul.f32 %v10, 1.442695
    %v12 = vpow.pop %v11
    %13 = vst [vmem:[#allocation4] sm:$0xff] %v12
    // Predicated region
    $region2: #{tpu_custom_call.1} parent=1 // pred_check
      _
    $region3: #{tpu_custom_call.1} parent=1 // pred_check_branch
      %15 = sbr.rel (0) target = $region5
    $region4: #{tpu_custom_call.1} parent=1 // pred_region
      %s17 = ssub.s32 128, 128
      %18 = vsyncadd [#allocation5], %s17
      %s20 = sshll.u32 [#allocation4], 4
      %s21 = int_to_ptr.vmem [resolvable:$true] %s20
      %23 = dma.vmem_to_hbm [thread:$0]  %s21, 128, %s1, [#allocation5]
    $region5: #{tpu_custom_call.1} parent=1 // pred_fallthru
      _
    // Predicated region
    $region6: #{tpu_custom_call.1} parent=1 // pred_check
      _
    $region7: #{tpu_custom_call.1} parent=1 // pred_check_branch
      %25 = sbr.rel (0) target = $region9
    $region8: #{tpu_custom_call.1} parent=1 // pred_region
      %26 = dma.done [#allocation5], 128
    $region9: #{tpu_custom_call.1} parent=1 // pred_fallthru
      _
    %27 = vsyncpa [#allocation5], 1

</llo_original>
